<compile_context>
chip_gen: v6e
topology: v6e:2x2x1
jax: 0.10.0
libtpu: 0.0.40
codegen_flags: <defaults>
</compile_context>

<pallas_src>
import jax
import jax.numpy as jnp
from jax.experimental import pallas as pl
from jax.experimental.pallas import tpu as pltpu

_OUT_PAD = 128        # lane-dense padded output width (one f32 vreg row)
_OUT_VALID = 5        # ctr(1) | size(2) | offset(2)
_ROW_TILE_CAP = 1024  # keeps h (row_tile, H3p) + double buffers well under VMEM


def _round_up(a, b):
    return (a + b - 1) // b * b


def _cdiv(a, b):
    return (a + b - 1) // b


# ----------------------------- Pallas kernel ------------------------------ #
def _center_mlp_kernel(x_ref, w1_ref, b1_ref, w2_ref, b2_ref, out_ref):
    # Fused first layer of all three heads: h = relu(x @ W1_all + b1_all).
    h = jnp.dot(x_ref[...], w1_ref[...],
                preferred_element_type=jnp.float32) + b1_ref[...]
    h = jnp.maximum(h, 0.0)

    # Fused (block-diagonal) second layer, padded to 128 output lanes so the
    # store below is a full-width, unmasked vst.
    y = jnp.dot(h.astype(w2_ref.dtype), w2_ref[...],
                preferred_element_type=jnp.float32) + b2_ref[...]

    # Clamped sigmoid on columns 0..2 (ctr + size); offset (cols 3..4) raw.
    col = jax.lax.broadcasted_iota(jnp.int32, y.shape, dimension=1)
    sig = jnp.clip(jax.nn.sigmoid(y), 1e-4, 1.0 - 1e-4)
    out_ref[...] = jnp.where(col < 3, sig, y)


# ---------------------------- pallas_call wrapper -------------------------- #
def center_mlp_fused(x_flat, w1, b1, w2, b2):
    """x_flat: (N, C_in) f32.  Returns (N, 5) f32: [ctr | size(2) | offset(2)]."""
    n, c_in = x_flat.shape
    hid3 = w1.shape[1]

    # Choose grid/tile to minimize row padding (tile is a multiple of 8).
    n8 = _round_up(n, 8)
    grid = max(1, _cdiv(n8, _ROW_TILE_CAP))
    row_tile = _round_up(_cdiv(n8, grid), 8)
    padded_n = row_tile * grid

    x_pad = x_flat
    if padded_n != n:
        x_pad = jnp.pad(x_flat, ((0, padded_n - n), (0, 0)))
    x_pad = x_pad.astype(jnp.bfloat16)   # halve the x DMA; f32 acc in-kernel

    flops = 2 * padded_n * (c_in * hid3 + hid3 * _OUT_PAD)
    bytes_accessed = (padded_n * c_in * 2          # x (bf16)
                      + w1.size * 2 + b1.size * 4  # params
                      + w2.size * 2 + b2.size * 4
                      + padded_n * _OUT_PAD * 4)   # output (f32)

    full = lambda i: (0, 0)
    row = lambda i: (i, 0)

    out = pl.pallas_call(
        _center_mlp_kernel,
        out_shape=jax.ShapeDtypeStruct((padded_n, _OUT_PAD), jnp.float32),
        grid_spec=pltpu.PrefetchScalarGridSpec(
            num_scalar_prefetch=0,
            grid=(grid,),
            in_specs=[
                pl.BlockSpec((row_tile, c_in), row),   # x row tile
                pl.BlockSpec(w1.shape, full),          # fused W1 (constant idx)
                pl.BlockSpec(b1.shape, full),
                pl.BlockSpec(w2.shape, full),          # fused block-diag W2
                pl.BlockSpec(b2.shape, full),
            ],
            out_specs=pl.BlockSpec((row_tile, _OUT_PAD), row),
        ),
        compiler_params=pltpu.CompilerParams(
            dimension_semantics=("parallel",)),
        cost_estimate=pl.CostEstimate(
            flops=flops,
            transcendentals=padded_n * _OUT_PAD,
            bytes_accessed=bytes_accessed),
    )(x_pad, w1, b1, w2, b2)

    return out[:n, :_OUT_VALID]


# ------------------------------ Module wrapper ------------------------------ #
class CenterMLPPallas:
    def __init__(self, inplanes=64, channel=256, feat_sz=20, stride=16,
                 key=jax.random.PRNGKey(0)):
        self.feat_sz = feat_sz
        self.stride = stride
        self.img_sz = feat_sz * stride
        self.inplanes = inplanes
        self.channel = channel

        def xavier(k, fan_in, fan_out):
            bound = (6.0 / (fan_in + fan_out)) ** 0.5
            return jax.random.uniform(k, (fan_in, fan_out), jnp.float32,
                                      -bound, bound)

        def bias(k, fan_in, out):
            bound = 1.0 / (fan_in ** 0.5)
            return jax.random.uniform(k, (1, out), jnp.float32, -bound, bound)

        keys = jax.random.split(key, 12)
        # ctr head:   Linear(in, ch) -> ReLU -> Linear(ch, 1)
        w1c = xavier(keys[0], inplanes, channel); b1c = bias(keys[1], inplanes, channel)
        w2c = xavier(keys[2], channel, 1);        b2c = bias(keys[3], channel, 1)
        # size head:  -> 2
        w1s = xavier(keys[4], inplanes, channel); b1s = bias(keys[5], inplanes, channel)
        w2s = xavier(keys[6], channel, 2);        b2s = bias(keys[7], channel, 2)
        # offset head: -> 2
        w1o = xavier(keys[8], inplanes, channel); b1o = bias(keys[9], inplanes, channel)
        w2o = xavier(keys[10], channel, 2);       b2o = bias(keys[11], channel, 2)

        # Fused first layer: hidden columns ordered [ctr | size | offset],
        # zero-padded up to a multiple of 128 lanes (lane-dense hidden).
        hid3 = 3 * channel
        hid3_pad = _round_up(hid3, 128)
        w1_all = jnp.zeros((inplanes, hid3_pad), jnp.float32)
        w1_all = w1_all.at[:, 0 * channel:1 * channel].set(w1c)
        w1_all = w1_all.at[:, 1 * channel:2 * channel].set(w1s)
        w1_all = w1_all.at[:, 2 * channel:3 * channel].set(w1o)
        b1_all = jnp.zeros((1, hid3_pad), jnp.float32)
        b1_all = b1_all.at[:, 0:hid3].set(
            jnp.concatenate([b1c, b1s, b1o], axis=1))

        # Fused block-diagonal second layer, padded to 128 output lanes:
        # cols 0 = ctr, 1:3 = size, 3:5 = offset, 5:128 = zero padding.
        w2_all = jnp.zeros((hid3_pad, _OUT_PAD), jnp.float32)
        w2_all = w2_all.at[0 * channel:1 * channel, 0:1].set(w2c)
        w2_all = w2_all.at[1 * channel:2 * channel, 1:3].set(w2s)
        w2_all = w2_all.at[2 * channel:3 * channel, 3:5].set(w2o)
        b2_all = jnp.zeros((1, _OUT_PAD), jnp.float32)
        b2_all = b2_all.at[:, 0:_OUT_VALID].set(
            jnp.concatenate([b2c, b2s, b2o], axis=1))

        # bf16 MXU operands (f32 accumulation in-kernel); biases stay f32.
        self.w1 = w1_all.astype(jnp.bfloat16)
        self.b1 = b1_all
        self.w2 = w2_all.astype(jnp.bfloat16)
        self.b2 = b2_all

    # ---- bbox decode (plain JAX glue; matches torch cal_bbox) ----
    def cal_bbox(self, score_map_ctr, size_map, offset_map):
        bs = score_map_ctr.shape[0]
        fs = self.feat_sz
        flat = score_map_ctr.reshape(bs, -1)
        idx = jnp.argmax(flat, axis=1)                        # (B,)
        idx_y = (idx // fs).astype(jnp.float32)[:, None]      # (B,1)
        idx_x = (idx % fs).astype(jnp.float32)[:, None]       # (B,1)

        gidx = idx[:, None, None]                             # (B,1,1)
        size = jnp.take_along_axis(size_map.reshape(bs, 2, -1), gidx, axis=2)[..., 0]
        offset = jnp.take_along_axis(offset_map.reshape(bs, 2, -1), gidx, axis=2)[..., 0]

        bbox = jnp.concatenate(
            [(idx_x + offset[:, :1]) / fs,
             (idx_y + offset[:, 1:]) / fs,
             size],
            axis=1)                                           # (B, 4)
        return bbox

    def __call__(self, x):
        """x: (B, HW, inplanes) with HW == feat_sz**2 (token-major layout)."""
        bs, hw, c_in = x.shape
        assert hw == self.feat_sz * self.feat_sz and c_in == self.inplanes

        x_flat = x.reshape(bs * hw, c_in)
        y = center_mlp_fused(x_flat, self.w1, self.b1, self.w2, self.b2)  # (N,5)
        y = y.reshape(bs, hw, _OUT_VALID)

        fs = self.feat_sz

        def to_map(v):  # (B, HW, C) -> (B, C, feat_sz, feat_sz)
            c = v.shape[-1]
            return v.transpose(0, 2, 1).reshape(bs, c, fs, fs)

        score_map_ctr = to_map(y[..., 0:1])
        size_map = to_map(y[..., 1:3])
        offset_map = to_map(y[..., 3:5])

        # TODO(synk): gt_score_map branch of forward() not implemented (inference path only).
        bbox = self.cal_bbox(score_map_ctr, size_map, offset_map)
        return score_map_ctr, bbox, size_map, offset_map


# ---------------------------------- main ----------------------------------- #
if __name__ == "__main__":
    # Small shapes consistent with the module: inplanes=32, channel=64, feat_sz=8
    B, INPLANES, CHANNEL, FEAT_SZ = 2, 32, 64, 8
    HW = FEAT_SZ * FEAT_SZ

    key = jax.random.PRNGKey(0)
    k_x, k_p = jax.random.split(key)
    x = jax.random.normal(k_x, (B, HW, INPLANES), dtype=jnp.float32)

    head = CenterMLPPallas(inplanes=INPLANES, channel=CHANNEL,
                           feat_sz=FEAT_SZ, stride=16, key=k_p)

    score_map_ctr, bbox, size_map, offset_map = head(x)
    jax.block_until_ready((score_map_ctr, bbox, size_map, offset_map))

    # Shape checks against the torch module's contract.
    assert score_map_ctr.shape == (B, 1, FEAT_SZ, FEAT_SZ)
    assert size_map.shape == (B, 2, FEAT_SZ, FEAT_SZ)
    assert offset_map.shape == (B, 2, FEAT_SZ, FEAT_SZ)
    assert bbox.shape == (B, 4)

    # Numerical check vs a bf16-matched pure-JAX reference of the fused math.
    xb = x.reshape(-1, INPLANES).astype(jnp.bfloat16)
    h_ref = jnp.maximum(
        jnp.dot(xb, head.w1, preferred_element_type=jnp.float32) + head.b1, 0.0)
    y_ref = jnp.dot(h_ref.astype(jnp.bfloat16), head.w2,
                    preferred_element_type=jnp.float32) + head.b2
    sig_ref = jnp.clip(jax.nn.sigmoid(y_ref), 1e-4, 1.0 - 1e-4)
    y_ref = jnp.where(jnp.arange(_OUT_PAD)[None, :] < 3, sig_ref, y_ref)
    y_ref = y_ref[:, :_OUT_VALID]

    y_ker = center_mlp_fused(x.reshape(-1, INPLANES),
                             head.w1, head.b1, head.w2, head.b2)
    jax.block_until_ready((y_ker, y_ref))
    assert bool(jnp.all(jnp.isfinite(y_ker)))
    assert bool(jnp.allclose(y_ker, y_ref, atol=1e-2, rtol=1e-2))

    print("KERNEL_OK")
</pallas_src>

<mosaic_0001>
module attributes {stable_mosaic.version = 11 : i64} {
  func.func @_center_mlp_kernel(%arg0: i32, %arg1: memref<128x32xbf16, #tpu.memory_space<vmem>>, %arg2: memref<32x256xbf16, #tpu.memory_space<vmem>>, %arg3: memref<1x256xf32, #tpu.memory_space<vmem>>, %arg4: memref<256x128xbf16, #tpu.memory_space<vmem>>, %arg5: memref<1x128xf32, #tpu.memory_space<vmem>>, %arg6: memref<128x128xf32, #tpu.memory_space<vmem>>) attributes {dimension_semantics = [#tpu.dimension_semantics<parallel>], iteration_bounds = array<i64: 1>, scalar_prefetch = 0 : i64, scratch_operands = 0 : i64, tpu.core_type = #tpu.core_type<tc>, window_params = [{transform_indices = @transform_0, window_bounds = array<i64: 128, 32>}, {pipeline_mode = #tpu.pipeline_mode<synchronous>, transform_indices = @transform_1, window_bounds = array<i64: 32, 256>}, {pipeline_mode = #tpu.pipeline_mode<synchronous>, transform_indices = @transform_2, window_bounds = array<i64: 1, 256>}, {pipeline_mode = #tpu.pipeline_mode<synchronous>, transform_indices = @transform_3, window_bounds = array<i64: 256, 128>}, {pipeline_mode = #tpu.pipeline_mode<synchronous>, transform_indices = @transform_4, window_bounds = array<i64: 1, 128>}, {transform_indices = @transform_5, window_bounds = array<i64: 128, 128>}]} {
    %c0 = arith.constant 0 : index
    %c0_0 = arith.constant 0 : index
    %0 = vector.load %arg1[%c0, %c0_0] : memref<128x32xbf16, #tpu.memory_space<vmem>>, vector<128x32xbf16>
    %c0_1 = arith.constant 0 : index
    %c0_2 = arith.constant 0 : index
    %1 = vector.load %arg2[%c0_1, %c0_2] : memref<32x256xbf16, #tpu.memory_space<vmem>>, vector<32x256xbf16>
    %cst = arith.constant dense<0.000000e+00> : vector<128x256xf32>
    %2 = tpu.matmul %0, %1, %cst {dimension_numbers = #tpu.dot_dimension_numbers<[1], [0], [0], [1], [0, 0, 1, 1], [], []>} : vector<128x32xbf16>, vector<32x256xbf16>, vector<128x256xf32> -> vector<128x256xf32>
    %c0_3 = arith.constant 0 : index
    %c0_4 = arith.constant 0 : index
    %3 = vector.load %arg3[%c0_3, %c0_4] : memref<1x256xf32, #tpu.memory_space<vmem>>, vector<1x256xf32>
    %4 = vector.broadcast %3 : vector<1x256xf32> to vector<128x256xf32>
    %5 = arith.addf %2, %4 : vector<128x256xf32>
    %cst_5 = arith.constant 0.000000e+00 : f32
    %6 = vector.broadcast %cst_5 : f32 to vector<128x256xf32>
    %7 = arith.maximumf %5, %6 : vector<128x256xf32>
    %8 = arith.truncf %7 : vector<128x256xf32> to vector<128x256xbf16>
    %c0_6 = arith.constant 0 : index
    %c0_7 = arith.constant 0 : index
    %9 = vector.load %arg4[%c0_6, %c0_7] : memref<256x128xbf16, #tpu.memory_space<vmem>>, vector<256x128xbf16>
    %cst_8 = arith.constant dense<0.000000e+00> : vector<128x128xf32>
    %10 = tpu.matmul %8, %9, %cst_8 {dimension_numbers = #tpu.dot_dimension_numbers<[1], [0], [0], [1], [0, 0, 1, 1], [], []>} : vector<128x256xbf16>, vector<256x128xbf16>, vector<128x128xf32> -> vector<128x128xf32>
    %c0_9 = arith.constant 0 : index
    %c0_10 = arith.constant 0 : index
    %11 = vector.load %arg5[%c0_9, %c0_10] : memref<1x128xf32, #tpu.memory_space<vmem>>, vector<1x128xf32>
    %12 = vector.broadcast %11 : vector<1x128xf32> to vector<128x128xf32>
    %13 = arith.addf %10, %12 : vector<128x128xf32>
    %14 = tpu.iota {dimensions = array<i32: 1>} : vector<128x128xi32>
    %15 = arith.negf %13 : vector<128x128xf32>
    %16 = math.exp %15 : vector<128x128xf32>
    %cst_11 = arith.constant 1.000000e+00 : f32
    %17 = vector.broadcast %cst_11 : f32 to vector<128x128xf32>
    %18 = arith.addf %17, %16 : vector<128x128xf32>
    %19 = arith.divf %17, %18 : vector<128x128xf32>
    %cst_12 = arith.constant 9.99999974E-5 : f32
    %cst_13 = arith.constant 0.999899983 : f32
    %20 = vector.broadcast %cst_12 : f32 to vector<128x128xf32>
    %21 = arith.maximumf %20, %19 : vector<128x128xf32>
    %22 = vector.broadcast %cst_13 : f32 to vector<128x128xf32>
    %23 = arith.minimumf %22, %21 : vector<128x128xf32>
    %c3_i32 = arith.constant 3 : i32
    %24 = vector.broadcast %c3_i32 : i32 to vector<128x128xi32>
    %25 = arith.cmpi slt, %14, %24 : vector<128x128xi32>
    %26 = arith.select %25, %23, %13 : vector<128x128xi1>, vector<128x128xf32>
    %c0_14 = arith.constant 0 : index
    %c0_15 = arith.constant 0 : index
    %27 = vector.load %arg6[%c0_14, %c0_15] : memref<128x128xf32, #tpu.memory_space<vmem>>, vector<128x128xf32>
    tpu.vector_store %arg6[%c0_14, %c0_15], %26 {strides = array<i32>} : memref<128x128xf32, #tpu.memory_space<vmem>>, vector<128x128xf32>,
    return
  }
  func.func @transform_0(%arg0: i32) -> (i32, i32) {
    %c0_i32 = arith.constant 0 : i32
    %c0_i32_0 = arith.constant 0 : i32
    return %arg0, %c0_i32 : i32, i32
  }
  func.func @transform_1(%arg0: i32) -> (i32, i32) {
    %c0_i32 = arith.constant 0 : i32
    %c0_i32_0 = arith.constant 0 : i32
    %c0_i32_1 = arith.constant 0 : i32
    return %c0_i32, %c0_i32_0 : i32, i32
  }
  func.func @transform_2(%arg0: i32) -> (i32, i32) {
    %c0_i32 = arith.constant 0 : i32
    %c0_i32_0 = arith.constant 0 : i32
    %c0_i32_1 = arith.constant 0 : i32
    return %c0_i32, %c0_i32_0 : i32, i32
  }
  func.func @transform_3(%arg0: i32) -> (i32, i32) {
    %c0_i32 = arith.constant 0 : i32
    %c0_i32_0 = arith.constant 0 : i32
    %c0_i32_1 = arith.constant 0 : i32
    return %c0_i32, %c0_i32_0 : i32, i32
  }
  func.func @transform_4(%arg0: i32) -> (i32, i32) {
    %c0_i32 = arith.constant 0 : i32
    %c0_i32_0 = arith.constant 0 : i32
    %c0_i32_1 = arith.constant 0 : i32
    return %c0_i32, %c0_i32_0 : i32, i32
  }
  func.func @transform_5(%arg0: i32) -> (i32, i32) {
    %c0_i32 = arith.constant 0 : i32
    %c0_i32_0 = arith.constant 0 : i32
    return %arg0, %c0_i32 : i32, i32
  }
}

</mosaic_0001>

<llo_original>
// kernel: tpu_custom_call.1
$region0: #{tpu_custom_call.1}
  #allocation0 [shape = 'u32[]', space=smem, size = 0x4, offset = 0x4, fixed_abs, tag = 'smem constant byte address 0x4 - core index']
  #allocation1 [shape = 'u32[144,128]{1,0:T(1,128)}', space=vmem, size = 0x12000, scoped, tag = 'internal scratch']
  %s0 = inlined_call_operand.vmem [shape: bf16[128,32], index: 0, kind: input, shape index: {}]
  %s1 = inlined_call_operand.vmem [shape: bf16[32,256], index: 1, kind: input, shape index: {}]
  %s2 = inlined_call_operand.vmem [shape: f32[1,256], index: 2, kind: input, shape index: {}]
  %s3 = inlined_call_operand.hbm [shape: bf16[256,128], index: 3, kind: input, shape index: {}]
  %s4 = inlined_call_operand.vmem [shape: f32[1,128], index: 4, kind: input, shape index: {}]
  %s5 = inlined_call_operand.hbm [shape: f32[128,128], index: 5, kind: output, shape index: {}]
  %s6 = sld [smem:[#allocation0]]
  $region34: #{tpu_custom_call.1} parent=0
    _
  %s8 = ssub.s32 1, %s6
  %s9 = scalar_select 0, %s8, %s6
  $region1: #{tpu_custom_call.1} parent=0
    #allocation2 [shape = 'u8[65536]{0}', space=vmem, size = 0x10000, scoped, tag = 'input window, operand 3, single buffered']
    #allocation3 [shape = 's32[1]{0}', space=sflag, size = 0x4, scoped, tag = 'scoped memory for tpu_custom_call.1']
    #allocation4 [shape = 's32[1]{0}', space=sflag, size = 0x4, scoped, tag = 'scoped memory for tpu_custom_call.1']
    #allocation5 [shape = 'u8[65536]{0}', space=vmem, size = 0x10000, scoped, tag = 'output window, operand 0, single buffered']
    %10 = vsyncpa [#allocation3], 0
    %11 = vsyncpa [#allocation4], 0
    // Predicated region
    $region2: #{tpu_custom_call.1} parent=1 // pred_check
      _
    $region3: #{tpu_custom_call.1} parent=1 // pred_check_branch
      %13 = sbr.rel (0) target = $region5
    $region4: #{tpu_custom_call.1} parent=1 // pred_region
      _
    $region5: #{tpu_custom_call.1} parent=1 // pred_fallthru
      _
    // Predicated region
    $region6: #{tpu_custom_call.1} parent=1 // pred_check
      _
    $region7: #{tpu_custom_call.1} parent=1 // pred_check_branch
      %15 = sbr.rel (0) target = $region9
    $region8: #{tpu_custom_call.1} parent=1 // pred_region
      _
    $region9: #{tpu_custom_call.1} parent=1 // pred_fallthru
      _
    // Predicated region
    $region10: #{tpu_custom_call.1} parent=1 // pred_check
      _
    $region11: #{tpu_custom_call.1} parent=1 // pred_check_branch
      %17 = sbr.rel (0) target = $region13
    $region12: #{tpu_custom_call.1} parent=1 // pred_region
      _
    $region13: #{tpu_custom_call.1} parent=1 // pred_fallthru
      _
    // Predicated region
    $region14: #{tpu_custom_call.1} parent=1 // pred_check
      _
    $region15: #{tpu_custom_call.1} parent=1 // pred_check_branch
      %19 = sbr.rel (0) target = $region17
    $region16: #{tpu_custom_call.1} parent=1 // pred_region
      %s21 = ssub.s32 2048, 2048
      %22 = vsyncadd [#allocation3], %s21
      %s23 = sshll.u32 [#allocation2], 4
      %s24 = int_to_ptr.vmem [resolvable:$true] %s23
      %29 = dma.hbm_to_vmem [thread:$0]  %s3, 2048, %s24, [#allocation3], 64, 64, 4
    $region17: #{tpu_custom_call.1} parent=1 // pred_fallthru
      _
    // Predicated region
    $region18: #{tpu_custom_call.1} parent=1 // pred_check
      _
    $region19: #{tpu_custom_call.1} parent=1 // pred_check_branch
      %31 = sbr.rel (0) target = $region21
    $region20: #{tpu_custom_call.1} parent=1 // pred_region
      _
    $region21: #{tpu_custom_call.1} parent=1 // pred_fallthru
      _
    // Predicated region
    $region22: #{tpu_custom_call.1} parent=1 // pred_check
      _
    $region23: #{tpu_custom_call.1} parent=1 // pred_check_branch
      %33 = sbr.rel (0) target = $region25
    $region24: #{tpu_custom_call.1} parent=1 // pred_region
      %34 = dma.done [#allocation3], 2048
    $region25: #{tpu_custom_call.1} parent=1 // pred_fallthru
      _
    %v36 = vld [vmem:[%s0] sm:$0xf]
    %v37 = vld [vmem:[%s0 + $0x4] sm:$0xf]
    %v38 = vld [vmem:[%s0 + $0x8] sm:$0xf]
    %v39 = vld [vmem:[%s0 + $0xc] sm:$0xf]
    %v40 = vld [vmem:[%s0 + $0x10] sm:$0xf]
    %v41 = vld [vmem:[%s0 + $0x14] sm:$0xf]
    %v42 = vld [vmem:[%s0 + $0x18] sm:$0xf]
    %v43 = vld [vmem:[%s0 + $0x1c] sm:$0xf]
    %v44 = vld [vmem:[%s0 + $0x20] sm:$0xf]
    %v45 = vld [vmem:[%s0 + $0x24] sm:$0xf]
    %v46 = vld [vmem:[%s0 + $0x28] sm:$0xf]
    %v47 = vld [vmem:[%s0 + $0x2c] sm:$0xf]
    %v48 = vld [vmem:[%s0 + $0x30] sm:$0xf]
    %v49 = vld [vmem:[%s0 + $0x34] sm:$0xf]
    %v50 = vld [vmem:[%s0 + $0x38] sm:$0xf]
    %v51 = vld [vmem:[%s0 + $0x3c] sm:$0xf]
    %v52 = vld [vmem:[%s1] sm:$0xff]
    %v53 = vld [vmem:[%s1 + $0x8] sm:$0xff]
    %v54 = vld [vmem:[%s1 + $0x10] sm:$0xff]
    %v55 = vld [vmem:[%s1 + $0x18] sm:$0xff]
    %v56 = vld [vmem:[%s2] sm:$0x3]
    %v58 = vlaneseq
    %v59 = vshrl.u32 %v58, 7
    %v60 = vsub.s32 0, %v59
    %v61 = vrot.slane %v56, %v60
    %v62 = vlaneseq
    %v63 = vshrl.u32 %v62, 7
    %v64 = vsub.s32 1, %v63
    %v65 = vrot.slane %v56, %v64
    %v84 = vunpack.c.l.b16 %v36
    %v85 = vunpack.c.l.b16 %v37
    %v86 = vunpack.c.l.b16 %v38
    %v87 = vunpack.c.l.b16 %v39
    %v88 = vunpack.c.l.b16 %v40
    %v89 = vunpack.c.l.b16 %v41
    %v90 = vunpack.c.l.b16 %v42
    %v91 = vunpack.c.l.b16 %v43
    %v92 = vunpack.c.l.b16 %v44
    %v93 = vunpack.c.l.b16 %v45
    %v94 = vunpack.c.l.b16 %v46
    %v95 = vunpack.c.l.b16 %v47
    %v96 = vunpack.c.l.b16 %v48
    %v97 = vunpack.c.l.b16 %v49
    %v98 = vunpack.c.l.b16 %v50
    %v99 = vunpack.c.l.b16 %v51
    %v100 = vpack.c.b16 %v85, %v84
    %v101 = vpack.c.b16 %v87, %v86
    %v102 = vpack.c.b16 %v89, %v88
    %v103 = vpack.c.b16 %v91, %v90
    %v104 = vpack.c.b16 %v93, %v92
    %v105 = vpack.c.b16 %v95, %v94
    %v106 = vpack.c.b16 %v97, %v96
    %v107 = vpack.c.b16 %v99, %v98
    %v112 = vunpack.c.l.b16 %v52
    %v113 = vunpack.c.h.b16 %v52
    %v114 = vunpack.c.l.b16 %v53
    %v115 = vunpack.c.h.b16 %v53
    %v116 = vunpack.c.l.b16 %v54
    %v117 = vunpack.c.h.b16 %v54
    %v118 = vunpack.c.l.b16 %v55
    %v119 = vunpack.c.h.b16 %v55
    %v120 = vpack.c.b16 %v114, %v112
    %v121 = vpack.c.b16 %v115, %v113
    %v122 = vpack.c.b16 %v118, %v116
    %v123 = vpack.c.b16 %v119, %v117
    %vm128 = vcmask 261120
    %v130 = vsel %vm128, %v100, 0
    %v133 = vsel %vm128, %v101, 0
    %v136 = vsel %vm128, %v102, 0
    %v139 = vsel %vm128, %v103, 0
    %v142 = vsel %vm128, %v104, 0
    %v145 = vsel %vm128, %v105, 0
    %v148 = vsel %vm128, %v106, 0
    %v151 = vsel %vm128, %v107, 0
    %153 = vmatprep.subr.bf16.mxu0 0
    %154 = vmatpush1.bf16.msra.mxu0 0
    %155 = vmatprep.subr.bf16.mxu0 0
    %156 = vmatpush1.bf16.msra.mxu0 0
    %157 = vmatprep.subr.bf16.mxu0 0
    %158 = vmatpush1.bf16.msra.mxu0 0
    %159 = vmatprep.subr.bf16.mxu0 0
    %160 = vmatpush1.bf16.msra.mxu0 0
    %161 = vmatprep.subr.bf16.mxu0 0
    %162 = vmatpush1.bf16.msra.mxu0 0
    %163 = vmatprep.subr.bf16.mxu0 0
    %164 = vmatpush1.bf16.msra.mxu0 0
    %165 = vmatprep.subr.bf16.mxu0 %v123
    %166 = vmatpush1.bf16.msra.mxu0 %v122
    %167 = vmatprep.subr.bf16.mxu0 %v121
    %168 = vmatpush1.bf16.msra.mxu0 %v120
    %169 = vmatprep.subr.bf16.mxu0 0
    %170 = vmatpush2.bf16.msra.mxu0 0
    %171 = vmatprep.subr.bf16.mxu0 0
    %172 = vmatpush2.bf16.msra.mxu0 0
    %173 = vmatprep.subr.bf16.mxu0 0
    %174 = vmatpush2.bf16.msra.mxu0 0
    %175 = vmatprep.subr.bf16.mxu0 0
    %176 = vmatpush2.bf16.msra.mxu0 0
    %177 = vmatprep.subr.bf16.mxu0 0
    %178 = vmatpush2.bf16.msra.mxu0 0
    %179 = vmatprep.subr.bf16.mxu0 0
    %180 = vmatpush2.bf16.msra.mxu0 0
    %181 = vmatprep.subr.bf16.mxu0 0
    %182 = vmatpush2.bf16.msra.mxu0 0
    %183 = vmatprep.subr.bf16.mxu0 0
    %184 = vmatpush2.bf16.msra.mxu0 0
    %185 = vmatprep.mubr.bf16.mxu0 0
    %186 = vmatmul.mubr.bf16.gmra.mxu0 %v130
    %v187 = vpop.f32.mrf.mxu0
    %v188 = vadd.f32 %v61, %v187
    %v189 = vpop.f32.mrf.mxu0
    %v190 = vadd.f32 %v65, %v189
    %v191 = vpop.f32.mrf.mxu0
    %v192 = vadd.f32 %v61, %v191
    %v193 = vpop.f32.mrf.mxu0
    %v194 = vadd.f32 %v65, %v193
    %195 = vmatprep.mubr.bf16.mxu0 0
    %196 = vmatmul.mubr.bf16.gmra.mxu0 %v133
    %v197 = vpop.f32.mrf.mxu0
    %v198 = vadd.f32 %v61, %v197
    %v199 = vpop.f32.mrf.mxu0
    %v200 = vadd.f32 %v65, %v199
    %v201 = vpop.f32.mrf.mxu0
    %v202 = vadd.f32 %v61, %v201
    %v203 = vpop.f32.mrf.mxu0
    %v204 = vadd.f32 %v65, %v203
    %205 = vmatprep.mubr.bf16.mxu0 0
    %206 = vmatmul.mubr.bf16.gmra.mxu0 %v136
    %v207 = vpop.f32.mrf.mxu0
    %v208 = vadd.f32 %v61, %v207
    %v209 = vpop.f32.mrf.mxu0
    %v210 = vadd.f32 %v65, %v209
    %v211 = vpop.f32.mrf.mxu0
    %v212 = vadd.f32 %v61, %v211
    %v213 = vpop.f32.mrf.mxu0
    %v214 = vadd.f32 %v65, %v213
    %215 = vmatprep.mubr.bf16.mxu0 0
    %216 = vmatmul.mubr.bf16.gmra.mxu0 %v139
    %v217 = vpop.f32.mrf.mxu0
    %v218 = vadd.f32 %v61, %v217
    %v219 = vpop.f32.mrf.mxu0
    %v220 = vadd.f32 %v65, %v219
    %v221 = vpop.f32.mrf.mxu0
    %v222 = vadd.f32 %v61, %v221
    %v223 = vpop.f32.mrf.mxu0
    %v224 = vadd.f32 %v65, %v223
    %225 = vmatprep.mubr.bf16.mxu0 0
    %226 = vmatmul.mubr.bf16.gmra.mxu0 %v142
    %v227 = vpop.f32.mrf.mxu0
    %v228 = vadd.f32 %v61, %v227
    %v229 = vpop.f32.mrf.mxu0
    %v230 = vadd.f32 %v65, %v229
    %v231 = vpop.f32.mrf.mxu0
    %v232 = vadd.f32 %v61, %v231
    %v233 = vpop.f32.mrf.mxu0
    %v234 = vadd.f32 %v65, %v233
    %235 = vmatprep.mubr.bf16.mxu0 0
    %236 = vmatmul.mubr.bf16.gmra.mxu0 %v145
    %v237 = vpop.f32.mrf.mxu0
    %v238 = vadd.f32 %v61, %v237
    %v239 = vpop.f32.mrf.mxu0
    %v240 = vadd.f32 %v65, %v239
    %v241 = vpop.f32.mrf.mxu0
    %v242 = vadd.f32 %v61, %v241
    %v243 = vpop.f32.mrf.mxu0
    %v244 = vadd.f32 %v65, %v243
    %245 = vmatprep.mubr.bf16.mxu0 0
    %246 = vmatmul.mubr.bf16.gmra.mxu0 %v148
    %v247 = vpop.f32.mrf.mxu0
    %v248 = vadd.f32 %v61, %v247
    %v249 = vpop.f32.mrf.mxu0
    %v250 = vadd.f32 %v65, %v249
    %v251 = vpop.f32.mrf.mxu0
    %v252 = vadd.f32 %v61, %v251
    %v253 = vpop.f32.mrf.mxu0
    %v254 = vadd.f32 %v65, %v253
    %255 = vmatprep.mubr.bf16.mxu0 0
    %256 = vmatmul.mubr.bf16.gmra.mxu0 %v151
    %v257 = vpop.f32.mrf.mxu0
    %v258 = vadd.f32 %v61, %v257
    %v259 = vpop.f32.mrf.mxu0
    %v260 = vadd.f32 %v65, %v259
    %v261 = vpop.f32.mrf.mxu0
    %v262 = vadd.f32 %v61, %v261
    %v263 = vpop.f32.mrf.mxu0
    %v264 = vadd.f32 %v65, %v263
    %265 = vdwg.mxu0
    %v266 = vmax.f32 %v188, 0.0
    %v267 = vmax.f32 %v190, 0.0
    %v268 = vmax.f32 %v192, 0.0
    %v269 = vmax.f32 %v194, 0.0
    %v270 = vmax.f32 %v198, 0.0
    %v271 = vmax.f32 %v200, 0.0
    %v272 = vmax.f32 %v202, 0.0
    %v273 = vmax.f32 %v204, 0.0
    %v274 = vmax.f32 %v208, 0.0
    %v275 = vmax.f32 %v210, 0.0
    %v276 = vmax.f32 %v212, 0.0
    %v277 = vmax.f32 %v214, 0.0
    %v278 = vmax.f32 %v218, 0.0
    %v279 = vmax.f32 %v220, 0.0
    %v280 = vmax.f32 %v222, 0.0
    %v281 = vmax.f32 %v224, 0.0
    %v282 = vmax.f32 %v228, 0.0
    %v283 = vmax.f32 %v230, 0.0
    %v284 = vmax.f32 %v232, 0.0
    %v285 = vmax.f32 %v234, 0.0
    %v286 = vmax.f32 %v238, 0.0
    %v287 = vmax.f32 %v240, 0.0
    %v288 = vmax.f32 %v242, 0.0
    %v289 = vmax.f32 %v244, 0.0
    %v290 = vmax.f32 %v248, 0.0
    %v291 = vmax.f32 %v250, 0.0
    %v292 = vmax.f32 %v252, 0.0
    %v293 = vmax.f32 %v254, 0.0
    %v294 = vmax.f32 %v258, 0.0
    %v295 = vmax.f32 %v260, 0.0
    %v296 = vmax.f32 %v262, 0.0
    %v297 = vmax.f32 %v264, 0.0
    %v298 = vpack.c.bf16 %v268, %v266
    %v299 = vpack.c.bf16 %v269, %v267
    %v300 = vpack.c.bf16 %v272, %v270
    %v301 = vpack.c.bf16 %v273, %v271
    %v302 = vpack.c.bf16 %v276, %v274
    %v303 = vpack.c.bf16 %v277, %v275
    %v304 = vpack.c.bf16 %v280, %v278
    %v305 = vpack.c.bf16 %v281, %v279
    %v306 = vpack.c.bf16 %v284, %v282
    %v307 = vpack.c.bf16 %v285, %v283
    %v308 = vpack.c.bf16 %v288, %v286
    %v309 = vpack.c.bf16 %v289, %v287
    %v310 = vpack.c.bf16 %v292, %v290
    %v311 = vpack.c.bf16 %v293, %v291
    %v312 = vpack.c.bf16 %v296, %v294
    %v313 = vpack.c.bf16 %v297, %v295
    %v314 = vld [vmem:[#allocation2] sm:$0xf]
    %v315 = vld [vmem:[#allocation2 + $0x4] sm:$0xf]
    %v316 = vld [vmem:[#allocation2 + $0x8] sm:$0xf]
    %v317 = vld [vmem:[#allocation2 + $0xc] sm:$0xf]
    %v318 = vld [vmem:[#allocation2 + $0x10] sm:$0xf]
    %v319 = vld [vmem:[#allocation2 + $0x14] sm:$0xf]
    %v320 = vld [vmem:[#allocation2 + $0x18] sm:$0xf]
    %v321 = vld [vmem:[#allocation2 + $0x1c] sm:$0xf]
    %v322 = vld [vmem:[#allocation2 + $0x20] sm:$0xf]
    %v323 = vld [vmem:[#allocation2 + $0x24] sm:$0xf]
    %v324 = vld [vmem:[#allocation2 + $0x28] sm:$0xf]
    %v325 = vld [vmem:[#allocation2 + $0x2c] sm:$0xf]
    %v326 = vld [vmem:[#allocation2 + $0x30] sm:$0xf]
    %v327 = vld [vmem:[#allocation2 + $0x34] sm:$0xf]
    %v328 = vld [vmem:[#allocation2 + $0x38] sm:$0xf]
    %v329 = vld [vmem:[#allocation2 + $0x3c] sm:$0xf]
    %v330 = vld [vmem:[#allocation2 + $0x40] sm:$0xf]
    %v331 = vld [vmem:[#allocation2 + $0x44] sm:$0xf]
    %v332 = vld [vmem:[#allocation2 + $0x48] sm:$0xf]
    %v333 = vld [vmem:[#allocation2 + $0x4c] sm:$0xf]
    %v334 = vld [vmem:[#allocation2 + $0x50] sm:$0xf]
    %v335 = vld [vmem:[#allocation2 + $0x54] sm:$0xf]
    %v336 = vld [vmem:[#allocation2 + $0x58] sm:$0xf]
    %v337 = vld [vmem:[#allocation2 + $0x5c] sm:$0xf]
    %v338 = vld [vmem:[#allocation2 + $0x60] sm:$0xf]
    %v339 = vld [vmem:[#allocation2 + $0x64] sm:$0xf]
    %v340 = vld [vmem:[#allocation2 + $0x68] sm:$0xf]
    %v341 = vld [vmem:[#allocation2 + $0x6c] sm:$0xf]
    %v342 = vld [vmem:[#allocation2 + $0x70] sm:$0xf]
    %v343 = vld [vmem:[#allocation2 + $0x74] sm:$0xf]
    %v344 = vld [vmem:[#allocation2 + $0x78] sm:$0xf]
    %v345 = vld [vmem:[#allocation2 + $0x7c] sm:$0xf]
    %v346 = vld [vmem:[%s4] sm:$0x1]
    %v348 = vlaneseq
    %v349 = vshrl.u32 %v348, 7
    %v350 = vsub.s32 0, %v349
    %v351 = vrot.slane %v346, %v350
    %v385 = vunpack.c.l.b16 %v314
    %v386 = vunpack.c.l.b16 %v315
    %v387 = vunpack.c.l.b16 %v316
    %v388 = vunpack.c.l.b16 %v317
    %v389 = vunpack.c.l.b16 %v318
    %v390 = vunpack.c.l.b16 %v319
    %v391 = vunpack.c.l.b16 %v320
    %v392 = vunpack.c.l.b16 %v321
    %v393 = vunpack.c.l.b16 %v322
    %v394 = vunpack.c.l.b16 %v323
    %v395 = vunpack.c.l.b16 %v324
    %v396 = vunpack.c.l.b16 %v325
    %v397 = vunpack.c.l.b16 %v326
    %v398 = vunpack.c.l.b16 %v327
    %v399 = vunpack.c.l.b16 %v328
    %v400 = vunpack.c.l.b16 %v329
    %v401 = vunpack.c.l.b16 %v330
    %v402 = vunpack.c.l.b16 %v331
    %v403 = vunpack.c.l.b16 %v332
    %v404 = vunpack.c.l.b16 %v333
    %v405 = vunpack.c.l.b16 %v334
    %v406 = vunpack.c.l.b16 %v335
    %v407 = vunpack.c.l.b16 %v336
    %v408 = vunpack.c.l.b16 %v337
    %v409 = vunpack.c.l.b16 %v338
    %v410 = vunpack.c.l.b16 %v339
    %v411 = vunpack.c.l.b16 %v340
    %v412 = vunpack.c.l.b16 %v341
    %v413 = vunpack.c.l.b16 %v342
    %v414 = vunpack.c.l.b16 %v343
    %v415 = vunpack.c.l.b16 %v344
    %v416 = vunpack.c.l.b16 %v345
    %v417 = vpack.c.b16 %v386, %v385
    %v418 = vpack.c.b16 %v388, %v387
    %v419 = vpack.c.b16 %v390, %v389
    %v420 = vpack.c.b16 %v392, %v391
    %v421 = vpack.c.b16 %v394, %v393
    %v422 = vpack.c.b16 %v396, %v395
    %v423 = vpack.c.b16 %v398, %v397
    %v424 = vpack.c.b16 %v400, %v399
    %v425 = vpack.c.b16 %v402, %v401
    %v426 = vpack.c.b16 %v404, %v403
    %v427 = vpack.c.b16 %v406, %v405
    %v428 = vpack.c.b16 %v408, %v407
    %v429 = vpack.c.b16 %v410, %v409
    %v430 = vpack.c.b16 %v412, %v411
    %v431 = vpack.c.b16 %v414, %v413
    %v432 = vpack.c.b16 %v416, %v415
    %449 = vmatprep.subr.bf16.mxu0 0
    %450 = vmatpush1.bf16.msra.mxu0 %v424
    %451 = vmatprep.subr.bf16.mxu0 0
    %452 = vmatpush1.bf16.msra.mxu0 %v423
    %453 = vmatprep.subr.bf16.mxu0 0
    %454 = vmatpush1.bf16.msra.mxu0 %v422
    %455 = vmatprep.subr.bf16.mxu0 0
    %456 = vmatpush1.bf16.msra.mxu0 %v421
    %457 = vmatprep.subr.bf16.mxu0 0
    %458 = vmatpush1.bf16.msra.mxu0 %v420
    %459 = vmatprep.subr.bf16.mxu0 0
    %460 = vmatpush1.bf16.msra.mxu0 %v419
    %461 = vmatprep.subr.bf16.mxu0 0
    %462 = vmatpush1.bf16.msra.mxu0 %v418
    %463 = vmatprep.subr.bf16.mxu0 0
    %464 = vmatpush1.bf16.msra.mxu0 %v417
    %465 = vmatprep.subr.bf16.mxu0 0
    %466 = vmatpush2.bf16.msra.mxu0 %v432
    %467 = vmatprep.subr.bf16.mxu0 0
    %468 = vmatpush2.bf16.msra.mxu0 %v431
    %469 = vmatprep.subr.bf16.mxu0 0
    %470 = vmatpush2.bf16.msra.mxu0 %v430
    %471 = vmatprep.subr.bf16.mxu0 0
    %472 = vmatpush2.bf16.msra.mxu0 %v429
    %473 = vmatprep.subr.bf16.mxu0 0
    %474 = vmatpush2.bf16.msra.mxu0 %v428
    %475 = vmatprep.subr.bf16.mxu0 0
    %476 = vmatpush2.bf16.msra.mxu0 %v427
    %477 = vmatprep.subr.bf16.mxu0 0
    %478 = vmatpush2.bf16.msra.mxu0 %v426
    %479 = vmatprep.subr.bf16.mxu0 0
    %480 = vmatpush2.bf16.msra.mxu0 %v425
    %481 = vmatprep.mubr.bf16.mxu0 %v299
    %482 = vmatmul.mubr.bf16.gmra.mxu0 %v298
    %v483 = vpop.f32.mrf.mxu0
    %v484 = vadd.f32 %v351, %v483
    %v485 = vpop.f32.mrf.mxu0
    %v486 = vpop.f32.mrf.mxu0
    %v487 = vadd.f32 %v351, %v486
    %v488 = vpop.f32.mrf.mxu0
    %489 = vmatprep.mubr.bf16.mxu0 %v301
    %490 = vmatmul.mubr.bf16.gmra.mxu0 %v300
    %v491 = vpop.f32.mrf.mxu0
    %v492 = vadd.f32 %v351, %v491
    %v493 = vpop.f32.mrf.mxu0
    %v494 = vpop.f32.mrf.mxu0
    %v495 = vadd.f32 %v351, %v494
    %v496 = vpop.f32.mrf.mxu0
    %497 = vmatprep.mubr.bf16.mxu0 %v303
    %498 = vmatmul.mubr.bf16.gmra.mxu0 %v302
    %v499 = vpop.f32.mrf.mxu0
    %v500 = vadd.f32 %v351, %v499
    %v501 = vpop.f32.mrf.mxu0
    %v502 = vpop.f32.mrf.mxu0
    %v503 = vadd.f32 %v351, %v502
    %v504 = vpop.f32.mrf.mxu0
    %505 = vmatprep.mubr.bf16.mxu0 %v305
    %506 = vmatmul.mubr.bf16.gmra.mxu0 %v304
    %v507 = vpop.f32.mrf.mxu0
    %v508 = vadd.f32 %v351, %v507
    %v509 = vpop.f32.mrf.mxu0
    %v510 = vpop.f32.mrf.mxu0
    %v511 = vadd.f32 %v351, %v510
    %v512 = vpop.f32.mrf.mxu0
    %513 = vmatprep.mubr.bf16.mxu0 %v307
    %514 = vmatmul.mubr.bf16.gmra.mxu0 %v306
    %v515 = vpop.f32.mrf.mxu0
    %v516 = vadd.f32 %v351, %v515
    %v517 = vpop.f32.mrf.mxu0
    %v518 = vpop.f32.mrf.mxu0
    %v519 = vadd.f32 %v351, %v518
    %v520 = vpop.f32.mrf.mxu0
    %521 = vmatprep.mubr.bf16.mxu0 %v309
    %522 = vmatmul.mubr.bf16.gmra.mxu0 %v308
    %v523 = vpop.f32.mrf.mxu0
    %v524 = vadd.f32 %v351, %v523
    %v525 = vpop.f32.mrf.mxu0
    %v526 = vpop.f32.mrf.mxu0
    %v527 = vadd.f32 %v351, %v526
    %v528 = vpop.f32.mrf.mxu0
    %529 = vmatprep.mubr.bf16.mxu0 %v311
    %530 = vmatmul.mubr.bf16.gmra.mxu0 %v310
    %v531 = vpop.f32.mrf.mxu0
    %v532 = vadd.f32 %v351, %v531
    %v533 = vpop.f32.mrf.mxu0
    %v534 = vpop.f32.mrf.mxu0
    %v535 = vadd.f32 %v351, %v534
    %v536 = vpop.f32.mrf.mxu0
    %537 = vmatprep.mubr.bf16.mxu0 %v313
    %538 = vmatmul.mubr.bf16.gmra.mxu0 %v312
    %v539 = vpop.f32.mrf.mxu0
    %v540 = vadd.f32 %v351, %v539
    %v541 = vpop.f32.mrf.mxu0
    %v542 = vpop.f32.mrf.mxu0
    %v543 = vadd.f32 %v351, %v542
    %v544 = vpop.f32.mrf.mxu0
    %545 = vdwg.mxu0
    %v546 = vlaneseq
    %v547 = vand.u32 %v546, 127
    %v548 = vxor.u32 %v484, 2147483648
    %v549 = vxor.u32 %v487, 2147483648
    %v550 = vxor.u32 %v492, 2147483648
    %v551 = vxor.u32 %v495, 2147483648
    %v552 = vxor.u32 %v500, 2147483648
    %v553 = vxor.u32 %v503, 2147483648
    %v554 = vxor.u32 %v508, 2147483648
    %v555 = vxor.u32 %v511, 2147483648
    %v556 = vxor.u32 %v516, 2147483648
    %v557 = vxor.u32 %v519, 2147483648
    %v558 = vxor.u32 %v524, 2147483648
    %v559 = vxor.u32 %v527, 2147483648
    %v560 = vxor.u32 %v532, 2147483648
    %v561 = vxor.u32 %v535, 2147483648
    %v562 = vxor.u32 %v540, 2147483648
    %v563 = vxor.u32 %v543, 2147483648
    %v564 = vmul.f32 %v548, 1.442695
    %v565 = vpow.pop %v564
    %v566 = vmul.f32 %v549, 1.442695
    %v567 = vpow.pop %v566
    %v568 = vmul.f32 %v550, 1.442695
    %v569 = vpow.pop %v568
    %v570 = vmul.f32 %v551, 1.442695
    %v571 = vpow.pop %v570
    %v572 = vmul.f32 %v552, 1.442695
    %v573 = vpow.pop %v572
    %v574 = vmul.f32 %v553, 1.442695
    %v575 = vpow.pop %v574
    %v576 = vmul.f32 %v554, 1.442695
    %v577 = vpow.pop %v576
    %v578 = vmul.f32 %v555, 1.442695
    %v579 = vpow.pop %v578
    %v580 = vmul.f32 %v556, 1.442695
    %v581 = vpow.pop %v580
    %v582 = vmul.f32 %v557, 1.442695
    %v583 = vpow.pop %v582
    %v584 = vmul.f32 %v558, 1.442695
    %v585 = vpow.pop %v584
    %v586 = vmul.f32 %v559, 1.442695
    %v587 = vpow.pop %v586
    %v588 = vmul.f32 %v560, 1.442695
    %v589 = vpow.pop %v588
    %v590 = vmul.f32 %v561, 1.442695
    %v591 = vpow.pop %v590
    %v592 = vmul.f32 %v562, 1.442695
    %v593 = vpow.pop %v592
    %v594 = vmul.f32 %v563, 1.442695
    %v595 = vpow.pop %v594
    %v596 = vadd.f32 %v565, 1.0
    %v597 = vadd.f32 %v567, 1.0
    %v598 = vadd.f32 %v569, 1.0
    %v599 = vadd.f32 %v571, 1.0
    %v600 = vadd.f32 %v573, 1.0
    %v601 = vadd.f32 %v575, 1.0
    %v602 = vadd.f32 %v577, 1.0
    %v603 = vadd.f32 %v579, 1.0
    %v604 = vadd.f32 %v581, 1.0
    %v605 = vadd.f32 %v583, 1.0
    %v606 = vadd.f32 %v585, 1.0
    %v607 = vadd.f32 %v587, 1.0
    %v608 = vadd.f32 %v589, 1.0
    %v609 = vadd.f32 %v591, 1.0
    %v610 = vadd.f32 %v593, 1.0
    %v611 = vadd.f32 %v595, 1.0
    %v612 = vrcp.pop %v596
    %v613 = vmul.f32 1.0, %v612
    %v614 = vrcp.pop %v597
    %v615 = vmul.f32 1.0, %v614
    %v616 = vrcp.pop %v598
    %v617 = vmul.f32 1.0, %v616
    %v618 = vrcp.pop %v599
    %v619 = vmul.f32 1.0, %v618
    %v620 = vrcp.pop %v600
    %v621 = vmul.f32 1.0, %v620
    %v622 = vrcp.pop %v601
    %v623 = vmul.f32 1.0, %v622
    %v624 = vrcp.pop %v602
    %v625 = vmul.f32 1.0, %v624
    %v626 = vrcp.pop %v603
    %v627 = vmul.f32 1.0, %v626
    %v628 = vrcp.pop %v604
    %v629 = vmul.f32 1.0, %v628
    %v630 = vrcp.pop %v605
    %v631 = vmul.f32 1.0, %v630
    %v632 = vrcp.pop %v606
    %v633 = vmul.f32 1.0, %v632
    %v634 = vrcp.pop %v607
    %v635 = vmul.f32 1.0, %v634
    %v636 = vrcp.pop %v608
    %v637 = vmul.f32 1.0, %v636
    %v638 = vrcp.pop %v609
    %v639 = vmul.f32 1.0, %v638
    %v640 = vrcp.pop %v610
    %v641 = vmul.f32 1.0, %v640
    %v642 = vrcp.pop %v611
    %v643 = vmul.f32 1.0, %v642
    %v644 = vmax.f32 %v613, 0.0001
    %v645 = vmax.f32 %v615, 0.0001
    %v646 = vmax.f32 %v617, 0.0001
    %v647 = vmax.f32 %v619, 0.0001
    %v648 = vmax.f32 %v621, 0.0001
    %v649 = vmax.f32 %v623, 0.0001
    %v650 = vmax.f32 %v625, 0.0001
    %v651 = vmax.f32 %v627, 0.0001
    %v652 = vmax.f32 %v629, 0.0001
    %v653 = vmax.f32 %v631, 0.0001
    %v654 = vmax.f32 %v633, 0.0001
    %v655 = vmax.f32 %v635, 0.0001
    %v656 = vmax.f32 %v637, 0.0001
    %v657 = vmax.f32 %v639, 0.0001
    %v658 = vmax.f32 %v641, 0.0001
    %v659 = vmax.f32 %v643, 0.0001
    %v660 = vmin.f32 %v644, 0.9999
    %v661 = vmin.f32 %v645, 0.9999
    %v662 = vmin.f32 %v646, 0.9999
    %v663 = vmin.f32 %v647, 0.9999
    %v664 = vmin.f32 %v648, 0.9999
    %v665 = vmin.f32 %v649, 0.9999
    %v666 = vmin.f32 %v650, 0.9999
    %v667 = vmin.f32 %v651, 0.9999
    %v668 = vmin.f32 %v652, 0.9999
    %v669 = vmin.f32 %v653, 0.9999
    %v670 = vmin.f32 %v654, 0.9999
    %v671 = vmin.f32 %v655, 0.9999
    %v672 = vmin.f32 %v656, 0.9999
    %v673 = vmin.f32 %v657, 0.9999
    %v674 = vmin.f32 %v658, 0.9999
    %v675 = vmin.f32 %v659, 0.9999
    %vm676 = vcmp.lt.s32.totalorder %v547, 3
    %v677 = vsel %vm676, %v660, %v484
    %v678 = vsel %vm676, %v661, %v487
    %v679 = vsel %vm676, %v662, %v492
    %v680 = vsel %vm676, %v663, %v495
    %v681 = vsel %vm676, %v664, %v500
    %v682 = vsel %vm676, %v665, %v503
    %v683 = vsel %vm676, %v666, %v508
    %v684 = vsel %vm676, %v667, %v511
    %v685 = vsel %vm676, %v668, %v516
    %v686 = vsel %vm676, %v669, %v519
    %v687 = vsel %vm676, %v670, %v524
    %v688 = vsel %vm676, %v671, %v527
    %v689 = vsel %vm676, %v672, %v532
    %v690 = vsel %vm676, %v673, %v535
    %v691 = vsel %vm676, %v674, %v540
    %v692 = vsel %vm676, %v675, %v543
    %693 = vst [vmem:[#allocation5] sm:$0xff] %v677
    %694 = vst [vmem:[#allocation5 + $0x8] sm:$0xff] %v678
    %695 = vst [vmem:[#allocation5 + $0x10] sm:$0xff] %v679
    %696 = vst [vmem:[#allocation5 + $0x18] sm:$0xff] %v680
    %697 = vst [vmem:[#allocation5 + $0x20] sm:$0xff] %v681
    %698 = vst [vmem:[#allocation5 + $0x28] sm:$0xff] %v682
    %699 = vst [vmem:[#allocation5 + $0x30] sm:$0xff] %v683
    %700 = vst [vmem:[#allocation5 + $0x38] sm:$0xff] %v684
    %701 = vst [vmem:[#allocation5 + $0x40] sm:$0xff] %v685
    %702 = vst [vmem:[#allocation5 + $0x48] sm:$0xff] %v686
    %703 = vst [vmem:[#allocation5 + $0x50] sm:$0xff] %v687
    %704 = vst [vmem:[#allocation5 + $0x58] sm:$0xff] %v688
    %705 = vst [vmem:[#allocation5 + $0x60] sm:$0xff] %v689
    %706 = vst [vmem:[#allocation5 + $0x68] sm:$0xff] %v690
    %707 = vst [vmem:[#allocation5 + $0x70] sm:$0xff] %v691
    %708 = vst [vmem:[#allocation5 + $0x78] sm:$0xff] %v692
    // Predicated region
    $region26: #{tpu_custom_call.1} parent=1 // pred_check
      _
    $region27: #{tpu_custom_call.1} parent=1 // pred_check_branch
      %710 = sbr.rel (0) target = $region29
    $region28: #{tpu_custom_call.1} parent=1 // pred_region
      %s712 = ssub.s32 2048, 2048
      %713 = vsyncadd [#allocation4], %s712
      %s714 = sshll.u32 [#allocation5], 4
      %s715 = int_to_ptr.vmem [resolvable:$true] %s714
      %720 = dma.vmem_to_hbm [thread:$0]  %s715, 2048, %s5, [#allocation4], 128, 128, 8
    $region29: #{tpu_custom_call.1} parent=1 // pred_fallthru
      _
    // Predicated region
    $region30: #{tpu_custom_call.1} parent=1 // pred_check
      _
    $region31: #{tpu_custom_call.1} parent=1 // pred_check_branch
      %722 = sbr.rel (0) target = $region33
    $region32: #{tpu_custom_call.1} parent=1 // pred_region
      %723 = dma.done [#allocation4], 2048
    $region33: #{tpu_custom_call.1} parent=1 // pred_fallthru
      _
    %724 = vsyncpa [#allocation3], 1
    %725 = vsyncpa [#allocation4], 1

</llo_original>
